<compile_context>
chip_gen: v5e
topology: v5e:2x2
jax: 0.10.0
libtpu: 0.0.40
codegen_flags: <defaults>
</compile_context>

<pallas_src>
import jax
import jax.numpy as jnp
from jax.experimental import pallas as pl
from jax.experimental.pallas import tpu as pltpu

EPS = 1e-5
NEG_SLOPE = 0.01   # PyTorch nn.LeakyReLU default
F_PAD = 128        # all feature axes padded to one full lane width

# row indices inside the packed (16, F_PAD) vector-parameter buffer
_G1, _BE1, _B1 = 0, 1, 2      # BN1 gamma/beta, Linear1 bias
_G2, _BE2, _B2 = 3, 4, 5      # BN2 gamma/beta, Linear2 bias
_G3, _BE3, _B3 = 6, 7, 8      # BN3 gamma/beta, Linear3 bias
_G4, _BE4, _B4 = 9, 10, 11    # BN4 gamma/beta, Linear4 bias


def _leaky_relu(h):
    return jnp.where(h >= 0, h, NEG_SLOPE * h)


def autoencoder_kernel(x_ref, vp_ref, w_ref, recon_ref, xpad_ref):
    """x_ref: (B, input_dim); vp_ref: (16, F_PAD) f32; w_ref: (4, F_PAD, F_PAD)
    in the MXU dtype (bf16 or f32); xpad_ref: (B, F_PAD) f32 VMEM scratch."""
    batch = x_ref.shape[0]
    input_dim = x_ref.shape[1]
    n_inv = 1.0 / batch                   # static batch size
    mxu_dtype = w_ref.dtype               # weights are pre-cast wrapper-side

    def row(i):                           # (1, F_PAD) parameter vector
        return vp_ref[i:i + 1, :]

    def bn_linear(h, g_row, be_row, w_idx, b_row):
        gamma, beta, bias = row(g_row), row(be_row), row(b_row)
        w = w_ref[w_idx]                                          # (F_PAD, F_PAD)
        # Training-mode BatchNorm1d, centered two-pass variance (no E[x^2]-E[x]^2
        # cancellation).  BN(h) = (h - mu) * gamma * rsqrt(var+eps) + beta.
        mu = jnp.sum(h, axis=0, keepdims=True) * n_inv            # (1, K)
        d = h - mu                                                # (B, K)
        var = jnp.sum(d * d, axis=0, keepdims=True) * n_inv       # (1, K)
        s = gamma * jax.lax.rsqrt(var + EPS)                      # (1, K)
        bn_h = d * s + beta          # BN shift folded into the activation (VPU)
        # Single MXU matmul per layer; f32 accumulation, f32 bias add.
        y = jnp.dot(bn_h.astype(mxu_dtype), w,
                    preferred_element_type=jnp.float32)
        return y + bias

    # Zero-pad the compact input to 128 lanes inside the kernel (no wrapper-side
    # HBM pad/round-trip).
    xpad_ref[...] = jnp.zeros_like(xpad_ref)
    xpad_ref[:, :input_dim] = x_ref[...]
    x = xpad_ref[...]

    # ---------------- encoder ----------------
    h = _leaky_relu(bn_linear(x, _G1, _BE1, 0, _B1))
    code = jax.nn.sigmoid(bn_linear(h, _G2, _BE2, 1, _B2))
    # ---------------- decoder ----------------
    h = _leaky_relu(bn_linear(code, _G3, _BE3, 2, _B3))
    recon = bn_linear(h, _G4, _BE4, 3, _B4)

    recon_ref[...] = recon.astype(recon_ref.dtype)


def _vmem_cap_bytes():
    """Generation-aware VMEM budget: ~3/4 of physical (v7x 64 MiB -> ~48 MiB,
    v5e/v6e 128 MiB -> ~96 MiB).  Falls back to the v7x-safe 48 MiB."""
    try:
        info = pltpu.get_tpu_info()
        phys = getattr(info, "vmem_capacity_bytes", None)
        if phys:
            return int(phys) * 3 // 4
    except Exception:
        pass
    return 48 << 20


def _vmem_limit_bytes(batch, w_itemsize):
    # Live f32 activations / temporaries (h, d, d*d, bn_h, y, x scratch, recon,
    # bf16 copies, I/O buffers) — generous 10x-per-row estimate.
    act = 10 * batch * F_PAD * 4
    fixed = 4 * F_PAD * F_PAD * w_itemsize + 16 * F_PAD * 4   # packed params
    need = act + fixed + (2 << 20)                            # >= 2 MiB headroom
    cap = _vmem_cap_bytes()
    if need > cap:
        raise ValueError(
            f"batch={batch} too large for the fully-resident AutoEncoder kernel "
            "(training-mode BN needs full-batch statistics); see TODO(synk) "
            "batch-tiled two-pass variant.")
    return int(max(need, 4 << 20))


def autoencoder_forward(x, vec_params, w_params):
    """x: (B, input_dim) f32 (compact, un-padded).  vec_params: (16, F_PAD) f32.
    w_params: (4, F_PAD, F_PAD) in the desired MXU dtype (bf16 default pack).
    Returns reconstruction (B, input_dim) f32."""
    B, input_dim = x.shape
    assert input_dim <= F_PAD, "feature dims beyond 128 lanes not supported here"
    w_itemsize = jnp.dtype(w_params.dtype).itemsize
    recon_pad = pl.pallas_call(
        autoencoder_kernel,
        out_shape=jax.ShapeDtypeStruct((B, F_PAD), jnp.float32),
        in_specs=[pl.BlockSpec(memory_space=pltpu.MemorySpace.VMEM)] * 3,
        out_specs=pl.BlockSpec(memory_space=pltpu.MemorySpace.VMEM),
        scratch_shapes=[pltpu.VMEM((B, F_PAD), jnp.float32)],
        compiler_params=pltpu.CompilerParams(
            vmem_limit_bytes=_vmem_limit_bytes(B, w_itemsize)),
    )(x.astype(jnp.float32), vec_params, w_params)
    # Lane-dense 128-wide store + wrapper slice: right trade at small latency-
    # bound B.  TODO(synk): compact (B, input_dim) output path for large B.
    return recon_pad[:, :input_dim]


# ----------------------------------------------------------------------------
# Parameter construction / packing (wrapper side, done once).
# ----------------------------------------------------------------------------
def init_params(key, input_dim, code_dim):
    hidden = input_dim // 2
    keys = jax.random.split(key, 4)

    def linear(k, fan_in, fan_out):
        # PyTorch default Linear init: U(-1/sqrt(fan_in), 1/sqrt(fan_in)).
        kw, kb = jax.random.split(k)
        bound = 1.0 / jnp.sqrt(fan_in)
        w = jax.random.uniform(kw, (fan_in, fan_out), jnp.float32, -bound, bound)
        b = jax.random.uniform(kb, (1, fan_out), jnp.float32, -bound, bound)
        return w, b

    w1, b1 = linear(keys[0], input_dim, hidden)
    w2, b2 = linear(keys[1], hidden, code_dim)
    w3, b3 = linear(keys[2], code_dim, hidden)
    w4, b4 = linear(keys[3], hidden, input_dim)

    def bn(dim):   # PyTorch BatchNorm1d init: gamma=1, beta=0
        return jnp.ones((1, dim), jnp.float32), jnp.zeros((1, dim), jnp.float32)

    g1, be1 = bn(input_dim)
    g2, be2 = bn(hidden)
    g3, be3 = bn(code_dim)
    g4, be4 = bn(hidden)
    return dict(g1=g1, be1=be1, w1=w1, b1=b1, g2=g2, be2=be2, w2=w2, b2=b2,
                g3=g3, be3=be3, w3=w3, b3=b3, g4=g4, be4=be4, w4=w4, b4=b4)


def pack_params(p, mxu_dtype=jnp.bfloat16):
    """Pack 12 vectors into one (16, F_PAD) f32 buffer and 4 weights into a
    (4, F_PAD, F_PAD) buffer pre-cast to the MXU operand dtype (bf16 default:
    halves the weight DMA and removes in-kernel weight casts)."""
    def pad_vec(v):
        flat = v.reshape(-1).astype(jnp.float32)
        return jnp.zeros((F_PAD,), jnp.float32).at[: flat.shape[0]].set(flat)

    rows = [p["g1"], p["be1"], p["b1"],
            p["g2"], p["be2"], p["b2"],
            p["g3"], p["be3"], p["b3"],
            p["g4"], p["be4"], p["b4"]]
    vec = jnp.stack([pad_vec(r) for r in rows]
                    + [jnp.zeros((F_PAD,), jnp.float32)] * 4)     # (16, F_PAD)

    def pad_w(w):
        out = jnp.zeros((F_PAD, F_PAD), jnp.float32)
        return out.at[: w.shape[0], : w.shape[1]].set(w.astype(jnp.float32))

    wts = jnp.stack([pad_w(p["w1"]), pad_w(p["w2"]),
                     pad_w(p["w3"]), pad_w(p["w4"])])             # (4, F_PAD, F_PAD)
    return vec, wts.astype(mxu_dtype)


def reference_forward(x, p):
    """Pure-JAX (non-Pallas) reference of the same forward for a sanity check."""
    def bn(h, g, b):
        mu = h.mean(0, keepdims=True)
        var = ((h - mu) ** 2).mean(0, keepdims=True)
        return (h - mu) / jnp.sqrt(var + EPS) * g + b

    h = bn(x, p["g1"], p["be1"]) @ p["w1"] + p["b1"]
    h = jnp.where(h >= 0, h, NEG_SLOPE * h)
    code = jax.nn.sigmoid(bn(h, p["g2"], p["be2"]) @ p["w2"] + p["b2"])
    h = bn(code, p["g3"], p["be3"]) @ p["w3"] + p["b3"]
    h = jnp.where(h >= 0, h, NEG_SLOPE * h)
    return bn(h, p["g4"], p["be4"]) @ p["w4"] + p["b4"]


if __name__ == "__main__":
    key = jax.random.PRNGKey(0)
    k_x, k_p = jax.random.split(key)

    batch, input_dim, code_dim = 8, 32, 8      # hidden = 16
    x = jax.random.normal(k_x, (batch, input_dim), jnp.float32)
    params = init_params(k_p, input_dim, code_dim)
    ref = reference_forward(x, params)

    # f32 MXU pack: checked tightly against the pure-JAX reference.
    vec_f32, w_f32 = pack_params(params, mxu_dtype=jnp.float32)
    recon_f32 = jax.block_until_ready(autoencoder_forward(x, vec_f32, w_f32))
    assert recon_f32.shape == (batch, input_dim)
    err_f32 = float(jnp.max(jnp.abs(recon_f32 - ref)))
    assert jnp.allclose(recon_f32, ref, atol=5e-4, rtol=5e-4), \
        f"f32 max abs err {err_f32}"

    # Default bf16 MXU pack (bf16 operands / f32 accumulation / f32 elementwise):
    # looser check — bf16 operand rounding compounds through 4 normalized layers.
    vec_bf, w_bf = pack_params(params)          # bf16 weights by default
    recon_bf = jax.block_until_ready(autoencoder_forward(x, vec_bf, w_bf))
    assert recon_bf.shape == (batch, input_dim)
    assert bool(jnp.all(jnp.isfinite(recon_bf)))
    err_bf = float(jnp.max(jnp.abs(recon_bf - ref)))
    assert err_bf < 1.0, f"bf16 max abs err {err_bf}"

    print("KERNEL_OK")
</pallas_src>

<mosaic_0001>
module attributes {stable_mosaic.version = 11 : i64} {
  func.func @autoencoder_kernel(%arg0: memref<8x32xf32, #tpu.memory_space<vmem>>, %arg1: memref<16x128xf32, #tpu.memory_space<vmem>>, %arg2: memref<4x128x128xf32, #tpu.memory_space<vmem>>, %arg3: memref<8x128xf32, #tpu.memory_space<vmem>>, %arg4: memref<8x128xf32, #tpu.memory_space<vmem>>) attributes {dimension_semantics = [], scalar_prefetch = 0 : i64, scratch_operands = 1 : i64, tpu.core_type = #tpu.core_type<tc>} {
    %cst = arith.constant 0.000000e+00 : f32
    %0 = vector.broadcast %cst : f32 to vector<8x128xf32>
    %c0 = arith.constant 0 : index
    %c0_0 = arith.constant 0 : index
    %1 = vector.load %arg4[%c0, %c0_0] : memref<8x128xf32, #tpu.memory_space<vmem>>, vector<8x128xf32>
    tpu.vector_store %arg4[%c0, %c0_0], %0 {strides = array<i32>} : memref<8x128xf32, #tpu.memory_space<vmem>>, vector<8x128xf32>,
    %c0_1 = arith.constant 0 : index
    %c0_2 = arith.constant 0 : index
    %2 = vector.load %arg0[%c0_1, %c0_2] : memref<8x32xf32, #tpu.memory_space<vmem>>, vector<8x32xf32>
    %c0_3 = arith.constant 0 : index
    %c0_4 = arith.constant 0 : index
    %3 = vector.load %arg4[%c0_3, %c0_4] : memref<8x128xf32, #tpu.memory_space<vmem>>, vector<8x32xf32>
    tpu.vector_store %arg4[%c0_3, %c0_4], %2 {strides = array<i32>} : memref<8x128xf32, #tpu.memory_space<vmem>>, vector<8x32xf32>,
    %c0_5 = arith.constant 0 : index
    %c0_6 = arith.constant 0 : index
    %4 = vector.load %arg4[%c0_5, %c0_6] : memref<8x128xf32, #tpu.memory_space<vmem>>, vector<8x128xf32>
    %c0_7 = arith.constant 0 : index
    %c0_8 = arith.constant 0 : index
    %5 = vector.load %arg1[%c0_7, %c0_8] : memref<16x128xf32, #tpu.memory_space<vmem>>, vector<1x128xf32>
    %c1 = arith.constant 1 : index
    %c0_9 = arith.constant 0 : index
    %6 = vector.load %arg1[%c1, %c0_9] : memref<16x128xf32, #tpu.memory_space<vmem>>, vector<1x128xf32>
    %c2 = arith.constant 2 : index
    %c0_10 = arith.constant 0 : index
    %7 = vector.load %arg1[%c2, %c0_10] : memref<16x128xf32, #tpu.memory_space<vmem>>, vector<1x128xf32>
    %c0_11 = arith.constant 0 : index
    %c0_12 = arith.constant 0 : index
    %c0_13 = arith.constant 0 : index
    %8 = vector.load %arg2[%c0_11, %c0_12, %c0_13] : memref<4x128x128xf32, #tpu.memory_space<vmem>>, vector<1x128x128xf32>
    %9 = vector.shape_cast %8 : vector<1x128x128xf32> to vector<128x128xf32>
    %cst_14 = arith.constant dense<0.000000e+00> : vector<128xf32>
    %10 = vector.multi_reduction <add>, %4, %cst_14 [0] : vector<8x128xf32> to vector<128xf32>
    %11 = vector.shape_cast %10 : vector<128xf32> to vector<1x128xf32>
    %cst_15 = arith.constant 1.250000e-01 : f32
    %12 = vector.broadcast %cst_15 : f32 to vector<1x128xf32>
    %13 = arith.mulf %11, %12 : vector<1x128xf32>
    %14 = vector.broadcast %13 : vector<1x128xf32> to vector<8x128xf32>
    %15 = arith.subf %4, %14 : vector<8x128xf32>
    %16 = arith.mulf %15, %15 : vector<8x128xf32>
    %cst_16 = arith.constant dense<0.000000e+00> : vector<128xf32>
    %17 = vector.multi_reduction <add>, %16, %cst_16 [0] : vector<8x128xf32> to vector<128xf32>
    %18 = vector.shape_cast %17 : vector<128xf32> to vector<1x128xf32>
    %cst_17 = arith.constant 1.250000e-01 : f32
    %19 = vector.broadcast %cst_17 : f32 to vector<1x128xf32>
    %20 = arith.mulf %18, %19 : vector<1x128xf32>
    %cst_18 = arith.constant 9.99999974E-6 : f32
    %21 = vector.broadcast %cst_18 : f32 to vector<1x128xf32>
    %22 = arith.addf %20, %21 : vector<1x128xf32>
    %23 = math.rsqrt %22 : vector<1x128xf32>
    %24 = arith.mulf %5, %23 : vector<1x128xf32>
    %25 = vector.broadcast %24 : vector<1x128xf32> to vector<8x128xf32>
    %26 = arith.mulf %15, %25 : vector<8x128xf32>
    %27 = vector.broadcast %6 : vector<1x128xf32> to vector<8x128xf32>
    %28 = arith.addf %26, %27 : vector<8x128xf32>
    %cst_19 = arith.constant dense<0.000000e+00> : vector<8x128xf32>
    %29 = tpu.matmul %28, %9, %cst_19 {dimension_numbers = #tpu.dot_dimension_numbers<[1], [0], [0], [1], [0, 0, 1, 1], [], []>} : vector<8x128xf32>, vector<128x128xf32>, vector<8x128xf32> -> vector<8x128xf32>
    %30 = vector.broadcast %7 : vector<1x128xf32> to vector<8x128xf32>
    %31 = arith.addf %29, %30 : vector<8x128xf32>
    %cst_20 = arith.constant 0.000000e+00 : f32
    %32 = vector.broadcast %cst_20 : f32 to vector<8x128xf32>
    %33 = arith.cmpf oge, %31, %32 : vector<8x128xf32>
    %cst_21 = arith.constant 0.00999999977 : f32
    %34 = vector.broadcast %cst_21 : f32 to vector<8x128xf32>
    %35 = arith.mulf %34, %31 : vector<8x128xf32>
    %36 = arith.select %33, %31, %35 : vector<8x128xi1>, vector<8x128xf32>
    %c3 = arith.constant 3 : index
    %c0_22 = arith.constant 0 : index
    %37 = vector.load %arg1[%c3, %c0_22] : memref<16x128xf32, #tpu.memory_space<vmem>>, vector<1x128xf32>
    %c4 = arith.constant 4 : index
    %c0_23 = arith.constant 0 : index
    %38 = vector.load %arg1[%c4, %c0_23] : memref<16x128xf32, #tpu.memory_space<vmem>>, vector<1x128xf32>
    %c5 = arith.constant 5 : index
    %c0_24 = arith.constant 0 : index
    %39 = vector.load %arg1[%c5, %c0_24] : memref<16x128xf32, #tpu.memory_space<vmem>>, vector<1x128xf32>
    %c1_25 = arith.constant 1 : index
    %c0_26 = arith.constant 0 : index
    %c0_27 = arith.constant 0 : index
    %40 = vector.load %arg2[%c1_25, %c0_26, %c0_27] : memref<4x128x128xf32, #tpu.memory_space<vmem>>, vector<1x128x128xf32>
    %41 = vector.shape_cast %40 : vector<1x128x128xf32> to vector<128x128xf32>
    %cst_28 = arith.constant dense<0.000000e+00> : vector<128xf32>
    %42 = vector.multi_reduction <add>, %36, %cst_28 [0] : vector<8x128xf32> to vector<128xf32>
    %43 = vector.shape_cast %42 : vector<128xf32> to vector<1x128xf32>
    %cst_29 = arith.constant 1.250000e-01 : f32
    %44 = vector.broadcast %cst_29 : f32 to vector<1x128xf32>
    %45 = arith.mulf %43, %44 : vector<1x128xf32>
    %46 = vector.broadcast %45 : vector<1x128xf32> to vector<8x128xf32>
    %47 = arith.subf %36, %46 : vector<8x128xf32>
    %48 = arith.mulf %47, %47 : vector<8x128xf32>
    %cst_30 = arith.constant dense<0.000000e+00> : vector<128xf32>
    %49 = vector.multi_reduction <add>, %48, %cst_30 [0] : vector<8x128xf32> to vector<128xf32>
    %50 = vector.shape_cast %49 : vector<128xf32> to vector<1x128xf32>
    %cst_31 = arith.constant 1.250000e-01 : f32
    %51 = vector.broadcast %cst_31 : f32 to vector<1x128xf32>
    %52 = arith.mulf %50, %51 : vector<1x128xf32>
    %cst_32 = arith.constant 9.99999974E-6 : f32
    %53 = vector.broadcast %cst_32 : f32 to vector<1x128xf32>
    %54 = arith.addf %52, %53 : vector<1x128xf32>
    %55 = math.rsqrt %54 : vector<1x128xf32>
    %56 = arith.mulf %37, %55 : vector<1x128xf32>
    %57 = vector.broadcast %56 : vector<1x128xf32> to vector<8x128xf32>
    %58 = arith.mulf %47, %57 : vector<8x128xf32>
    %59 = vector.broadcast %38 : vector<1x128xf32> to vector<8x128xf32>
    %60 = arith.addf %58, %59 : vector<8x128xf32>
    %cst_33 = arith.constant dense<0.000000e+00> : vector<8x128xf32>
    %61 = tpu.matmul %60, %41, %cst_33 {dimension_numbers = #tpu.dot_dimension_numbers<[1], [0], [0], [1], [0, 0, 1, 1], [], []>} : vector<8x128xf32>, vector<128x128xf32>, vector<8x128xf32> -> vector<8x128xf32>
    %62 = vector.broadcast %39 : vector<1x128xf32> to vector<8x128xf32>
    %63 = arith.addf %61, %62 : vector<8x128xf32>
    %64 = arith.negf %63 : vector<8x128xf32>
    %65 = math.exp %64 : vector<8x128xf32>
    %cst_34 = arith.constant 1.000000e+00 : f32
    %66 = vector.broadcast %cst_34 : f32 to vector<8x128xf32>
    %67 = arith.addf %66, %65 : vector<8x128xf32>
    %68 = arith.divf %66, %67 : vector<8x128xf32>
    %c6 = arith.constant 6 : index
    %c0_35 = arith.constant 0 : index
    %69 = vector.load %arg1[%c6, %c0_35] : memref<16x128xf32, #tpu.memory_space<vmem>>, vector<1x128xf32>
    %c7 = arith.constant 7 : index
    %c0_36 = arith.constant 0 : index
    %70 = vector.load %arg1[%c7, %c0_36] : memref<16x128xf32, #tpu.memory_space<vmem>>, vector<1x128xf32>
    %c8 = arith.constant 8 : index
    %c0_37 = arith.constant 0 : index
    %71 = vector.load %arg1[%c8, %c0_37] : memref<16x128xf32, #tpu.memory_space<vmem>>, vector<1x128xf32>
    %c2_38 = arith.constant 2 : index
    %c0_39 = arith.constant 0 : index
    %c0_40 = arith.constant 0 : index
    %72 = vector.load %arg2[%c2_38, %c0_39, %c0_40] : memref<4x128x128xf32, #tpu.memory_space<vmem>>, vector<1x128x128xf32>
    %73 = vector.shape_cast %72 : vector<1x128x128xf32> to vector<128x128xf32>
    %cst_41 = arith.constant dense<0.000000e+00> : vector<128xf32>
    %74 = vector.multi_reduction <add>, %68, %cst_41 [0] : vector<8x128xf32> to vector<128xf32>
    %75 = vector.shape_cast %74 : vector<128xf32> to vector<1x128xf32>
    %cst_42 = arith.constant 1.250000e-01 : f32
    %76 = vector.broadcast %cst_42 : f32 to vector<1x128xf32>
    %77 = arith.mulf %75, %76 : vector<1x128xf32>
    %78 = vector.broadcast %77 : vector<1x128xf32> to vector<8x128xf32>
    %79 = arith.subf %68, %78 : vector<8x128xf32>
    %80 = arith.mulf %79, %79 : vector<8x128xf32>
    %cst_43 = arith.constant dense<0.000000e+00> : vector<128xf32>
    %81 = vector.multi_reduction <add>, %80, %cst_43 [0] : vector<8x128xf32> to vector<128xf32>
    %82 = vector.shape_cast %81 : vector<128xf32> to vector<1x128xf32>
    %cst_44 = arith.constant 1.250000e-01 : f32
    %83 = vector.broadcast %cst_44 : f32 to vector<1x128xf32>
    %84 = arith.mulf %82, %83 : vector<1x128xf32>
    %cst_45 = arith.constant 9.99999974E-6 : f32
    %85 = vector.broadcast %cst_45 : f32 to vector<1x128xf32>
    %86 = arith.addf %84, %85 : vector<1x128xf32>
    %87 = math.rsqrt %86 : vector<1x128xf32>
    %88 = arith.mulf %69, %87 : vector<1x128xf32>
    %89 = vector.broadcast %88 : vector<1x128xf32> to vector<8x128xf32>
    %90 = arith.mulf %79, %89 : vector<8x128xf32>
    %91 = vector.broadcast %70 : vector<1x128xf32> to vector<8x128xf32>
    %92 = arith.addf %90, %91 : vector<8x128xf32>
    %cst_46 = arith.constant dense<0.000000e+00> : vector<8x128xf32>
    %93 = tpu.matmul %92, %73, %cst_46 {dimension_numbers = #tpu.dot_dimension_numbers<[1], [0], [0], [1], [0, 0, 1, 1], [], []>} : vector<8x128xf32>, vector<128x128xf32>, vector<8x128xf32> -> vector<8x128xf32>
    %94 = vector.broadcast %71 : vector<1x128xf32> to vector<8x128xf32>
    %95 = arith.addf %93, %94 : vector<8x128xf32>
    %cst_47 = arith.constant 0.000000e+00 : f32
    %96 = vector.broadcast %cst_47 : f32 to vector<8x128xf32>
    %97 = arith.cmpf oge, %95, %96 : vector<8x128xf32>
    %cst_48 = arith.constant 0.00999999977 : f32
    %98 = vector.broadcast %cst_48 : f32 to vector<8x128xf32>
    %99 = arith.mulf %98, %95 : vector<8x128xf32>
    %100 = arith.select %97, %95, %99 : vector<8x128xi1>, vector<8x128xf32>
    %c9 = arith.constant 9 : index
    %c0_49 = arith.constant 0 : index
    %101 = vector.load %arg1[%c9, %c0_49] : memref<16x128xf32, #tpu.memory_space<vmem>>, vector<1x128xf32>
    %c10 = arith.constant 10 : index
    %c0_50 = arith.constant 0 : index
    %102 = vector.load %arg1[%c10, %c0_50] : memref<16x128xf32, #tpu.memory_space<vmem>>, vector<1x128xf32>
    %c11 = arith.constant 11 : index
    %c0_51 = arith.constant 0 : index
    %103 = vector.load %arg1[%c11, %c0_51] : memref<16x128xf32, #tpu.memory_space<vmem>>, vector<1x128xf32>
    %c3_52 = arith.constant 3 : index
    %c0_53 = arith.constant 0 : index
    %c0_54 = arith.constant 0 : index
    %104 = vector.load %arg2[%c3_52, %c0_53, %c0_54] : memref<4x128x128xf32, #tpu.memory_space<vmem>>, vector<1x128x128xf32>
    %105 = vector.shape_cast %104 : vector<1x128x128xf32> to vector<128x128xf32>
    %cst_55 = arith.constant dense<0.000000e+00> : vector<128xf32>
    %106 = vector.multi_reduction <add>, %100, %cst_55 [0] : vector<8x128xf32> to vector<128xf32>
    %107 = vector.shape_cast %106 : vector<128xf32> to vector<1x128xf32>
    %cst_56 = arith.constant 1.250000e-01 : f32
    %108 = vector.broadcast %cst_56 : f32 to vector<1x128xf32>
    %109 = arith.mulf %107, %108 : vector<1x128xf32>
    %110 = vector.broadcast %109 : vector<1x128xf32> to vector<8x128xf32>
    %111 = arith.subf %100, %110 : vector<8x128xf32>
    %112 = arith.mulf %111, %111 : vector<8x128xf32>
    %cst_57 = arith.constant dense<0.000000e+00> : vector<128xf32>
    %113 = vector.multi_reduction <add>, %112, %cst_57 [0] : vector<8x128xf32> to vector<128xf32>
    %114 = vector.shape_cast %113 : vector<128xf32> to vector<1x128xf32>
    %cst_58 = arith.constant 1.250000e-01 : f32
    %115 = vector.broadcast %cst_58 : f32 to vector<1x128xf32>
    %116 = arith.mulf %114, %115 : vector<1x128xf32>
    %cst_59 = arith.constant 9.99999974E-6 : f32
    %117 = vector.broadcast %cst_59 : f32 to vector<1x128xf32>
    %118 = arith.addf %116, %117 : vector<1x128xf32>
    %119 = math.rsqrt %118 : vector<1x128xf32>
    %120 = arith.mulf %101, %119 : vector<1x128xf32>
    %121 = vector.broadcast %120 : vector<1x128xf32> to vector<8x128xf32>
    %122 = arith.mulf %111, %121 : vector<8x128xf32>
    %123 = vector.broadcast %102 : vector<1x128xf32> to vector<8x128xf32>
    %124 = arith.addf %122, %123 : vector<8x128xf32>
    %cst_60 = arith.constant dense<0.000000e+00> : vector<8x128xf32>
    %125 = tpu.matmul %124, %105, %cst_60 {dimension_numbers = #tpu.dot_dimension_numbers<[1], [0], [0], [1], [0, 0, 1, 1], [], []>} : vector<8x128xf32>, vector<128x128xf32>, vector<8x128xf32> -> vector<8x128xf32>
    %126 = vector.broadcast %103 : vector<1x128xf32> to vector<8x128xf32>
    %127 = arith.addf %125, %126 : vector<8x128xf32>
    %c0_61 = arith.constant 0 : index
    %c0_62 = arith.constant 0 : index
    %128 = vector.load %arg3[%c0_61, %c0_62] : memref<8x128xf32, #tpu.memory_space<vmem>>, vector<8x128xf32>
    tpu.vector_store %arg3[%c0_61, %c0_62], %127 {strides = array<i32>} : memref<8x128xf32, #tpu.memory_space<vmem>>, vector<8x128xf32>,
    return
  }
}

</mosaic_0001>

<llo_original>
// kernel: tpu_custom_call.1
$region0: #{tpu_custom_call.1}
  #allocation0 [shape = 'u32[]', space=smem, size = 0x4, offset = 0x4, fixed_abs, tag = 'smem constant byte address 0x4 - core index']
  #allocation1 [shape = 'u32[72,128]{1,0:T(1,128)}', space=vmem, size = 0x9000, scoped, tag = 'internal scratch']
  #allocation2 [shape = 'f32[8,128]{1,0:T(8,128)}', space=vmem, size = 0x1000, scoped, tag = 'scratch operand']
  %s0 = inlined_call_operand.hbm [shape: f32[8,32], index: 0, kind: input, shape index: {}]
  %s1 = inlined_call_operand.hbm [shape: f32[16,128], index: 1, kind: input, shape index: {}]
  %s2 = inlined_call_operand.hbm [shape: f32[4,128,128], index: 2, kind: input, shape index: {}]
  %s3 = inlined_call_operand.hbm [shape: f32[8,128], index: 3, kind: output, shape index: {}]
  %s4 = sld [smem:[#allocation0]]
  $region34: #{tpu_custom_call.1} parent=0
    _
  %s6 = ssub.s32 1, %s4
  %s7 = scalar_select 0, %s6, %s4
  $region1: #{tpu_custom_call.1} parent=0
    #allocation3 [shape = 'u8[4096]{0}', space=vmem, size = 0x1000, scoped, tag = 'input window, operand 0, single buffered']
    #allocation4 [shape = 's32[1]{0}', space=sflag, size = 0x4, scoped, tag = 'scoped memory for tpu_custom_call.1']
    #allocation5 [shape = 's32[1]{0}', space=sflag, size = 0x4, scoped, tag = 'scoped memory for tpu_custom_call.1']
    #allocation6 [shape = 'u8[8192]{0}', space=vmem, size = 0x2000, scoped, tag = 'input window, operand 1, single buffered']
    #allocation7 [shape = 's32[1]{0}', space=sflag, size = 0x4, scoped, tag = 'scoped memory for tpu_custom_call.1']
    #allocation8 [shape = 'u8[262144]{0}', space=vmem, size = 0x40000, scoped, tag = 'input window, operand 2, single buffered']
    #allocation9 [shape = 'u8[4096]{0}', space=vmem, size = 0x1000, scoped, tag = 'output window, operand 0, single buffered']
    %8 = vsyncpa [#allocation4], 0
    %9 = vsyncpa [#allocation7], 0
    %10 = vsyncpa [#allocation5], 0
    // Predicated region
    $region2: #{tpu_custom_call.1} parent=1 // pred_check
      _
    $region3: #{tpu_custom_call.1} parent=1 // pred_check_branch
      %12 = sbr.rel (0) target = $region5
    $region4: #{tpu_custom_call.1} parent=1 // pred_region
      %14 = vsyncadd [#allocation4], 0
      %s16 = sshll.u32 %s0, 4
      %s17 = int_to_ptr.hbm [resolvable:$true] %s16
      %s18 = sshll.u32 [#allocation3], 4
      %s19 = int_to_ptr.vmem [resolvable:$true] %s18
      %21 = dma.hbm_to_vmem [thread:$0]  %s17, 128, %s19, [#allocation4]
    $region5: #{tpu_custom_call.1} parent=1 // pred_fallthru
      _
    // Predicated region
    $region6: #{tpu_custom_call.1} parent=1 // pred_check
      _
    $region7: #{tpu_custom_call.1} parent=1 // pred_check_branch
      %23 = sbr.rel (0) target = $region9
    $region8: #{tpu_custom_call.1} parent=1 // pred_region
      %25 = vsyncadd [#allocation7], 0
      %s26 = sshll.u32 %s1, 4
      %s27 = int_to_ptr.hbm [resolvable:$true] %s26
      %s28 = sshll.u32 [#allocation6], 4
      %s29 = int_to_ptr.vmem [resolvable:$true] %s28
      %34 = dma.hbm_to_vmem [thread:$0]  %s27, 256, %s29, [#allocation7], 128, 128, 8
    $region9: #{tpu_custom_call.1} parent=1 // pred_fallthru
      _
    // Predicated region
    $region10: #{tpu_custom_call.1} parent=1 // pred_check
      _
    $region11: #{tpu_custom_call.1} parent=1 // pred_check_branch
      %36 = sbr.rel (0) target = $region13
    $region12: #{tpu_custom_call.1} parent=1 // pred_region
      %38 = vsyncadd [#allocation7], 0
      %s39 = sshll.u32 %s2, 4
      %s40 = int_to_ptr.hbm [resolvable:$true] %s39
      %s41 = sshll.u32 [#allocation8], 4
      %s42 = int_to_ptr.vmem [resolvable:$true] %s41
      %47 = dma.hbm_to_vmem [thread:$0]  %s40, 8192, %s42, [#allocation7], 128, 128, 8
    $region13: #{tpu_custom_call.1} parent=1 // pred_fallthru
      _
    // Predicated region
    $region14: #{tpu_custom_call.1} parent=1 // pred_check
      _
    $region15: #{tpu_custom_call.1} parent=1 // pred_check_branch
      %49 = sbr.rel (0) target = $region17
    $region16: #{tpu_custom_call.1} parent=1 // pred_region
      %51 = dma.done [#allocation4], 128
    $region17: #{tpu_custom_call.1} parent=1 // pred_fallthru
      _
    // Predicated region
    $region18: #{tpu_custom_call.1} parent=1 // pred_check
      _
    $region19: #{tpu_custom_call.1} parent=1 // pred_check_branch
      %53 = sbr.rel (0) target = $region21
    $region20: #{tpu_custom_call.1} parent=1 // pred_region
      %55 = dma.done [#allocation7], 256
    $region21: #{tpu_custom_call.1} parent=1 // pred_fallthru
      _
    // Predicated region
    $region22: #{tpu_custom_call.1} parent=1 // pred_check
      _
    $region23: #{tpu_custom_call.1} parent=1 // pred_check_branch
      %57 = sbr.rel (0) target = $region25
    $region24: #{tpu_custom_call.1} parent=1 // pred_region
      %59 = dma.done [#allocation7], 8192
    $region25: #{tpu_custom_call.1} parent=1 // pred_fallthru
      _
    %60 = vst [vmem:[#allocation2] sm:$0xff] 0.0
    %v61 = vld [vmem:[#allocation3] sm:$0xff]
    %vm62 = vcmask 261120
    %63 = vst.msk [vmem:[#allocation2] sm:$0xff] %vm62, %v61
    %v64 = vld [vmem:[#allocation2] sm:$0xff]
    %v65 = vld [vmem:[#allocation6] sm:$0x1]
    %v66 = vld [vmem:[#allocation6 + $0x1] sm:$0x1]
    %v67 = vld [vmem:[#allocation6 + $0x2] sm:$0x1]
    %v68 = vld [vmem:[#allocation8] sm:$0xff]
    %v69 = vld [vmem:[#allocation8 + $0x8] sm:$0xff]
    %v70 = vld [vmem:[#allocation8 + $0x10] sm:$0xff]
    %v71 = vld [vmem:[#allocation8 + $0x18] sm:$0xff]
    %v72 = vld [vmem:[#allocation8 + $0x20] sm:$0xff]
    %v73 = vld [vmem:[#allocation8 + $0x28] sm:$0xff]
    %v74 = vld [vmem:[#allocation8 + $0x30] sm:$0xff]
    %v75 = vld [vmem:[#allocation8 + $0x38] sm:$0xff]
    %v76 = vld [vmem:[#allocation8 + $0x40] sm:$0xff]
    %v77 = vld [vmem:[#allocation8 + $0x48] sm:$0xff]
    %v78 = vld [vmem:[#allocation8 + $0x50] sm:$0xff]
    %v79 = vld [vmem:[#allocation8 + $0x58] sm:$0xff]
    %v80 = vld [vmem:[#allocation8 + $0x60] sm:$0xff]
    %v81 = vld [vmem:[#allocation8 + $0x68] sm:$0xff]
    %v82 = vld [vmem:[#allocation8 + $0x70] sm:$0xff]
    %v83 = vld [vmem:[#allocation8 + $0x78] sm:$0xff]
    %v84 = vrot.slane %v64, 4
    %v85 = vadd.f32 %v64, %v84
    %v86 = vrot.slane %v85, 2
    %v87 = vadd.f32 %v85, %v86
    %v88 = vrot.slane %v87, 1
    %v89 = vadd.f32 %v87, %v88
    %v90 = vmul.f32 %v89, 0.125
    %v91 = vsub.f32 %v64, %v90
    %v92 = vmul.f32 %v91, %v91
    %v93 = vrot.slane %v92, 4
    %v94 = vadd.f32 %v92, %v93
    %v95 = vrot.slane %v94, 2
    %v96 = vadd.f32 %v94, %v95
    %v97 = vrot.slane %v96, 1
    %v98 = vadd.f32 %v96, %v97
    %v99 = vmul.f32 %v98, 0.125
    %v100 = vadd.f32 %v99, 1e-05
    %v101 = vrsqrt.pop %v100
    %v102 = vmul.f32 %v101, %v100
    %v103 = vmul.f32 %v102, %v101
    %v104 = vmul.f32 0.5, %v103
    %v105 = vsub.f32 1.5, %v104
    %v106 = vmul.f32 %v101, %v105
    %vm107 = vweird.f32 %v100
    %vm108 = vweird.f32 %v101
    %vm109 = vmor %vm107, %vm108
    %v110 = vsel %vm109, %v101, %v106
    %v111 = vmul.f32 %v65, %v110
    %v112 = vperm.slane %v111, 0
    %v113 = vmul.f32 %v91, %v112
    %v114 = vperm.slane %v66, 0
    %v115 = vadd.f32 %v113, %v114
    %v116 = vperm.slane %v67, 0
    %117 = vmatpush.msra.mxu0 %v83
    %118 = vmatpush.msra.mxu0 %v82
    %119 = vmatpush.msra.mxu0 %v81
    %120 = vmatpush.msra.mxu0 %v80
    %121 = vmatpush.msra.mxu0 %v79
    %122 = vmatpush.msra.mxu0 %v78
    %123 = vmatpush.msra.mxu0 %v77
    %124 = vmatpush.msra.mxu0 %v76
    %125 = vmatpush.msra.mxu0 %v75
    %126 = vmatpush.msra.mxu0 %v74
    %127 = vmatpush.msra.mxu0 %v73
    %128 = vmatpush.msra.mxu0 %v72
    %129 = vmatpush.msra.mxu0 %v71
    %130 = vmatpush.msra.mxu0 %v70
    %131 = vmatpush.msra.mxu0 %v69
    %132 = vmatpush.msra.mxu0 %v68
    %133 = vmatmul.f32.gmra.mxu0 %v115
    %v134 = vpop.f32.mrf.mxu0
    %v135 = vadd.f32 %v116, %v134
    %136 = vdwg.mxu0
    %vm137 = vcmp.ge.f32.partialorder %v135, 0.0
    %v138 = vmul.f32 %v135, 0.01
    %v139 = vsel %vm137, %v135, %v138
    %v140 = vld [vmem:[#allocation6 + $0x3] sm:$0x1]
    %v141 = vld [vmem:[#allocation6 + $0x4] sm:$0x1]
    %v142 = vld [vmem:[#allocation6 + $0x5] sm:$0x1]
    %s143 = scalar_lea.vmem [#allocation8], 128
    %v144 = vld [vmem:[%s143] sm:$0xff]
    %v145 = vld [vmem:[%s143 + $0x8] sm:$0xff]
    %v146 = vld [vmem:[%s143 + $0x10] sm:$0xff]
    %v147 = vld [vmem:[%s143 + $0x18] sm:$0xff]
    %v148 = vld [vmem:[%s143 + $0x20] sm:$0xff]
    %v149 = vld [vmem:[%s143 + $0x28] sm:$0xff]
    %v150 = vld [vmem:[%s143 + $0x30] sm:$0xff]
    %v151 = vld [vmem:[%s143 + $0x38] sm:$0xff]
    %v152 = vld [vmem:[%s143 + $0x40] sm:$0xff]
    %v153 = vld [vmem:[%s143 + $0x48] sm:$0xff]
    %v154 = vld [vmem:[%s143 + $0x50] sm:$0xff]
    %v155 = vld [vmem:[%s143 + $0x58] sm:$0xff]
    %v156 = vld [vmem:[%s143 + $0x60] sm:$0xff]
    %v157 = vld [vmem:[%s143 + $0x68] sm:$0xff]
    %v158 = vld [vmem:[%s143 + $0x70] sm:$0xff]
    %v159 = vld [vmem:[%s143 + $0x78] sm:$0xff]
    %v160 = vrot.slane %v139, 4
    %v161 = vadd.f32 %v139, %v160
    %v162 = vrot.slane %v161, 2
    %v163 = vadd.f32 %v161, %v162
    %v164 = vrot.slane %v163, 1
    %v165 = vadd.f32 %v163, %v164
    %v166 = vmul.f32 %v165, 0.125
    %v167 = vsub.f32 %v139, %v166
    %v168 = vmul.f32 %v167, %v167
    %v169 = vrot.slane %v168, 4
    %v170 = vadd.f32 %v168, %v169
    %v171 = vrot.slane %v170, 2
    %v172 = vadd.f32 %v170, %v171
    %v173 = vrot.slane %v172, 1
    %v174 = vadd.f32 %v172, %v173
    %v175 = vmul.f32 %v174, 0.125
    %v176 = vadd.f32 %v175, 1e-05
    %v177 = vrsqrt.pop %v176
    %v178 = vmul.f32 %v177, %v176
    %v179 = vmul.f32 %v178, %v177
    %v180 = vmul.f32 0.5, %v179
    %v181 = vsub.f32 1.5, %v180
    %v182 = vmul.f32 %v177, %v181
    %vm183 = vweird.f32 %v176
    %vm184 = vweird.f32 %v177
    %vm185 = vmor %vm183, %vm184
    %v186 = vsel %vm185, %v177, %v182
    %v187 = vmul.f32 %v140, %v186
    %v188 = vperm.slane %v187, 0
    %v189 = vmul.f32 %v167, %v188
    %v190 = vperm.slane %v141, 0
    %v191 = vadd.f32 %v189, %v190
    %v192 = vperm.slane %v142, 0
    %193 = vmatpush.msra.mxu0 %v159
    %194 = vmatpush.msra.mxu0 %v158
    %195 = vmatpush.msra.mxu0 %v157
    %196 = vmatpush.msra.mxu0 %v156
    %197 = vmatpush.msra.mxu0 %v155
    %198 = vmatpush.msra.mxu0 %v154
    %199 = vmatpush.msra.mxu0 %v153
    %200 = vmatpush.msra.mxu0 %v152
    %201 = vmatpush.msra.mxu0 %v151
    %202 = vmatpush.msra.mxu0 %v150
    %203 = vmatpush.msra.mxu0 %v149
    %204 = vmatpush.msra.mxu0 %v148
    %205 = vmatpush.msra.mxu0 %v147
    %206 = vmatpush.msra.mxu0 %v146
    %207 = vmatpush.msra.mxu0 %v145
    %208 = vmatpush.msra.mxu0 %v144
    %209 = vmatmul.f32.gmra.mxu0 %v191
    %v210 = vpop.f32.mrf.mxu0
    %v211 = vadd.f32 %v192, %v210
    %212 = vdwg.mxu0
    %v213 = vxor.u32 %v211, 2147483648
    %v214 = vmul.f32 %v213, 1.442695
    %v215 = vpow.pop %v214
    %v216 = vadd.f32 %v215, 1.0
    %v217 = vrcp.pop %v216
    %v218 = vmul.f32 %v216, %v217
    %v219 = vsub.f32 1.0, %v218
    %v220 = vmul.f32 %v217, %v219
    %v221 = vadd.f32 %v217, %v220
    %vm222 = vweird.f32 %v216
    %vm223 = vweird.f32 %v217
    %vm224 = vmor %vm222, %vm223
    %v225 = vsel %vm224, %v217, %v221
    %v226 = vand.u32 2147483647, %v216
    %vm227 = vcmp.eq.f32.partialorder %v226, 8.507059e+37
    %v228 = vand.u32 %v216, 2147483648
    %v229 = vor.u32 1.1754944e-38, %v228
    %v230 = vsel %vm227, %v229, %v225
    %v231 = vmul.f32 1.0, %v230
    %v232 = vld [vmem:[#allocation6 + $0x6] sm:$0x1]
    %v233 = vld [vmem:[#allocation6 + $0x7] sm:$0x1]
    %v234 = vld [vmem:[#allocation6 + $0x8] sm:$0x1]
    %s235 = scalar_lea.vmem [#allocation8], 256
    %v236 = vld [vmem:[%s235] sm:$0xff]
    %v237 = vld [vmem:[%s235 + $0x8] sm:$0xff]
    %v238 = vld [vmem:[%s235 + $0x10] sm:$0xff]
    %v239 = vld [vmem:[%s235 + $0x18] sm:$0xff]
    %v240 = vld [vmem:[%s235 + $0x20] sm:$0xff]
    %v241 = vld [vmem:[%s235 + $0x28] sm:$0xff]
    %v242 = vld [vmem:[%s235 + $0x30] sm:$0xff]
    %v243 = vld [vmem:[%s235 + $0x38] sm:$0xff]
    %v244 = vld [vmem:[%s235 + $0x40] sm:$0xff]
    %v245 = vld [vmem:[%s235 + $0x48] sm:$0xff]
    %v246 = vld [vmem:[%s235 + $0x50] sm:$0xff]
    %v247 = vld [vmem:[%s235 + $0x58] sm:$0xff]
    %v248 = vld [vmem:[%s235 + $0x60] sm:$0xff]
    %v249 = vld [vmem:[%s235 + $0x68] sm:$0xff]
    %v250 = vld [vmem:[%s235 + $0x70] sm:$0xff]
    %v251 = vld [vmem:[%s235 + $0x78] sm:$0xff]
    %v252 = vrot.slane %v231, 4
    %v253 = vadd.f32 %v231, %v252
    %v254 = vrot.slane %v253, 2
    %v255 = vadd.f32 %v253, %v254
    %v256 = vrot.slane %v255, 1
    %v257 = vadd.f32 %v255, %v256
    %v258 = vmul.f32 %v257, 0.125
    %v259 = vsub.f32 %v231, %v258
    %v260 = vmul.f32 %v259, %v259
    %v261 = vrot.slane %v260, 4
    %v262 = vadd.f32 %v260, %v261
    %v263 = vrot.slane %v262, 2
    %v264 = vadd.f32 %v262, %v263
    %v265 = vrot.slane %v264, 1
    %v266 = vadd.f32 %v264, %v265
    %v267 = vmul.f32 %v266, 0.125
    %v268 = vadd.f32 %v267, 1e-05
    %v269 = vrsqrt.pop %v268
    %v270 = vmul.f32 %v269, %v268
    %v271 = vmul.f32 %v270, %v269
    %v272 = vmul.f32 0.5, %v271
    %v273 = vsub.f32 1.5, %v272
    %v274 = vmul.f32 %v269, %v273
    %vm275 = vweird.f32 %v268
    %vm276 = vweird.f32 %v269
    %vm277 = vmor %vm275, %vm276
    %v278 = vsel %vm277, %v269, %v274
    %v279 = vmul.f32 %v232, %v278
    %v280 = vperm.slane %v279, 0
    %v281 = vmul.f32 %v259, %v280
    %v282 = vperm.slane %v233, 0
    %v283 = vadd.f32 %v281, %v282
    %v284 = vperm.slane %v234, 0
    %285 = vmatpush.msra.mxu0 %v251
    %286 = vmatpush.msra.mxu0 %v250
    %287 = vmatpush.msra.mxu0 %v249
    %288 = vmatpush.msra.mxu0 %v248
    %289 = vmatpush.msra.mxu0 %v247
    %290 = vmatpush.msra.mxu0 %v246
    %291 = vmatpush.msra.mxu0 %v245
    %292 = vmatpush.msra.mxu0 %v244
    %293 = vmatpush.msra.mxu0 %v243
    %294 = vmatpush.msra.mxu0 %v242
    %295 = vmatpush.msra.mxu0 %v241
    %296 = vmatpush.msra.mxu0 %v240
    %297 = vmatpush.msra.mxu0 %v239
    %298 = vmatpush.msra.mxu0 %v238
    %299 = vmatpush.msra.mxu0 %v237
    %300 = vmatpush.msra.mxu0 %v236
    %301 = vmatmul.f32.gmra.mxu0 %v283
    %v302 = vpop.f32.mrf.mxu0
    %v303 = vadd.f32 %v284, %v302
    %304 = vdwg.mxu0
    %vm305 = vcmp.ge.f32.partialorder %v303, 0.0
    %v306 = vmul.f32 %v303, 0.01
    %v307 = vsel %vm305, %v303, %v306
    %v308 = vld [vmem:[#allocation6 + $0x9] sm:$0x1]
    %v309 = vld [vmem:[#allocation6 + $0xa] sm:$0x1]
    %v310 = vld [vmem:[#allocation6 + $0xb] sm:$0x1]
    %s311 = scalar_lea.vmem [#allocation8], 384
    %v312 = vld [vmem:[%s311] sm:$0xff]
    %v313 = vld [vmem:[%s311 + $0x8] sm:$0xff]
    %v314 = vld [vmem:[%s311 + $0x10] sm:$0xff]
    %v315 = vld [vmem:[%s311 + $0x18] sm:$0xff]
    %v316 = vld [vmem:[%s311 + $0x20] sm:$0xff]
    %v317 = vld [vmem:[%s311 + $0x28] sm:$0xff]
    %v318 = vld [vmem:[%s311 + $0x30] sm:$0xff]
    %v319 = vld [vmem:[%s311 + $0x38] sm:$0xff]
    %v320 = vld [vmem:[%s311 + $0x40] sm:$0xff]
    %v321 = vld [vmem:[%s311 + $0x48] sm:$0xff]
    %v322 = vld [vmem:[%s311 + $0x50] sm:$0xff]
    %v323 = vld [vmem:[%s311 + $0x58] sm:$0xff]
    %v324 = vld [vmem:[%s311 + $0x60] sm:$0xff]
    %v325 = vld [vmem:[%s311 + $0x68] sm:$0xff]
    %v326 = vld [vmem:[%s311 + $0x70] sm:$0xff]
    %v327 = vld [vmem:[%s311 + $0x78] sm:$0xff]
    %v328 = vrot.slane %v307, 4
    %v329 = vadd.f32 %v307, %v328
    %v330 = vrot.slane %v329, 2
    %v331 = vadd.f32 %v329, %v330
    %v332 = vrot.slane %v331, 1
    %v333 = vadd.f32 %v331, %v332
    %v334 = vmul.f32 %v333, 0.125
    %v335 = vsub.f32 %v307, %v334
    %v336 = vmul.f32 %v335, %v335
    %v337 = vrot.slane %v336, 4
    %v338 = vadd.f32 %v336, %v337
    %v339 = vrot.slane %v338, 2
    %v340 = vadd.f32 %v338, %v339
    %v341 = vrot.slane %v340, 1
    %v342 = vadd.f32 %v340, %v341
    %v343 = vmul.f32 %v342, 0.125
    %v344 = vadd.f32 %v343, 1e-05
    %v345 = vrsqrt.pop %v344
    %v346 = vmul.f32 %v345, %v344
    %v347 = vmul.f32 %v346, %v345
    %v348 = vmul.f32 0.5, %v347
    %v349 = vsub.f32 1.5, %v348
    %v350 = vmul.f32 %v345, %v349
    %vm351 = vweird.f32 %v344
    %vm352 = vweird.f32 %v345
    %vm353 = vmor %vm351, %vm352
    %v354 = vsel %vm353, %v345, %v350
    %v355 = vmul.f32 %v308, %v354
    %v356 = vperm.slane %v355, 0
    %v357 = vmul.f32 %v335, %v356
    %v358 = vperm.slane %v309, 0
    %v359 = vadd.f32 %v357, %v358
    %v360 = vperm.slane %v310, 0
    %361 = vmatpush.msra.mxu0 %v327
    %362 = vmatpush.msra.mxu0 %v326
    %363 = vmatpush.msra.mxu0 %v325
    %364 = vmatpush.msra.mxu0 %v324
    %365 = vmatpush.msra.mxu0 %v323
    %366 = vmatpush.msra.mxu0 %v322
    %367 = vmatpush.msra.mxu0 %v321
    %368 = vmatpush.msra.mxu0 %v320
    %369 = vmatpush.msra.mxu0 %v319
    %370 = vmatpush.msra.mxu0 %v318
    %371 = vmatpush.msra.mxu0 %v317
    %372 = vmatpush.msra.mxu0 %v316
    %373 = vmatpush.msra.mxu0 %v315
    %374 = vmatpush.msra.mxu0 %v314
    %375 = vmatpush.msra.mxu0 %v313
    %376 = vmatpush.msra.mxu0 %v312
    %377 = vmatmul.f32.gmra.mxu0 %v359
    %v378 = vpop.f32.mrf.mxu0
    %v379 = vadd.f32 %v360, %v378
    %380 = vdwg.mxu0
    %381 = vst [vmem:[#allocation9] sm:$0xff] %v379
    // Predicated region
    $region26: #{tpu_custom_call.1} parent=1 // pred_check
      _
    $region27: #{tpu_custom_call.1} parent=1 // pred_check_branch
      %383 = sbr.rel (0) target = $region29
    $region28: #{tpu_custom_call.1} parent=1 // pred_region
      %385 = vsyncadd [#allocation5], 0
      %s387 = sshll.u32 [#allocation9], 4
      %s388 = int_to_ptr.vmem [resolvable:$true] %s387
      %s389 = sshll.u32 %s3, 4
      %s390 = int_to_ptr.hbm [resolvable:$true] %s389
      %392 = dma.vmem_to_hbm [thread:$0]  %s388, 128, %s390, [#allocation5]
    $region29: #{tpu_custom_call.1} parent=1 // pred_fallthru
      _
    // Predicated region
    $region30: #{tpu_custom_call.1} parent=1 // pred_check
      _
    $region31: #{tpu_custom_call.1} parent=1 // pred_check_branch
      %394 = sbr.rel (0) target = $region33
    $region32: #{tpu_custom_call.1} parent=1 // pred_region
      %396 = dma.done [#allocation5], 128
    $region33: #{tpu_custom_call.1} parent=1 // pred_fallthru
      _
    %397 = vsyncpa [#allocation4], 1
    %398 = vsyncpa [#allocation7], 1
    %399 = vsyncpa [#allocation5], 1

</llo_original>
